<compile_context>
chip_gen: v7x
topology: tpu7x:2x2x1
jax: 0.10.0
libtpu: 0.0.40
codegen_flags: <defaults>
</compile_context>

<pallas_src>
import functools

import jax
import jax.numpy as jnp
from jax.experimental import pallas as pl
from jax.experimental.pallas import tpu as pltpu

HIDDEN_DEPTH = 20
OUT_CHANNELS = 11


def _round_up(x, m):
    return (x + m - 1) // m * m


def _actionnet_kernel(x_ref, w1_ref, b1_ref, w2_ref, b2_ref, o_ref,
                      *, wp, hh, ww, lanes):
    # x_ref : (C_in_p,  L)      zero-padded-grid pixels, flattened, lane-padded to L
    # w1_ref: (C_hid_p, 9*C_in_p)   b1_ref: (C_hid_p, 1)
    # w2_ref: (C_out_p, 9*C_hid_p)  b2_ref: (C_out_p, 1)
    # o_ref : (C_out_p, L)
    #
    # Interior mask of the padded (hp x wp) grid embedded in L lanes, built from
    # an iota (all-f32 div avoids relying on vector integer division).
    q = jax.lax.broadcasted_iota(jnp.int32, (1, lanes), 1)
    qf = q.astype(jnp.float32)
    row = ((qf + 0.5) * (1.0 / wp)).astype(jnp.int32)          # == q // wp (q small)
    col = q - row * wp                                          # == q %  wp
    interior = jnp.where(
        (row >= 1) & (row <= hh) & (col >= 1) & (col <= ww), 1.0, 0.0)

    def tap_stack(v):
        # 9 lane-rotated copies, concatenated along sublanes -> (9*C, L).
        # Tap t = ky*3+kx reads neighbor offset d = (ky-1)*wp + (kx-1); rotation
        # wraparound only touches border / pad lanes (masked or discarded).
        pieces = []
        for ky in range(3):
            for kx in range(3):
                d = (ky - 1) * wp + (kx - 1)
                pieces.append(v if d == 0
                              else pltpu.roll(v, shift=(-d) % lanes, axis=1))
        return jnp.concatenate(pieces, axis=0)

    x = x_ref[...]

    # ---- layer 1: hidden 3x3 conv (+bias, ReLU) as one K=9*C_in matmul ----
    h = jnp.dot(w1_ref[...], tap_stack(x), preferred_element_type=jnp.float32)
    h = jnp.maximum(h + b1_ref[...], 0.0) * interior            # exact zeros on border

    # ---- layer 2: end 3x3 conv (+bias, ReLU) as one K=9*C_hid matmul ----
    y = jnp.dot(w2_ref[...], tap_stack(h), preferred_element_type=jnp.float32)
    o_ref[...] = jnp.maximum(y + b2_ref[...], 0.0).astype(o_ref.dtype)


def action_net_forward(x_nchw, params):
    """ActionNet forward: relu(conv3x3(x, w1)+b1) -> relu(conv3x3(., w2)+b2).

    x_nchw: (N, C_hid, H, W) float32.
    params: w1 (C_hid, C_hid, 3, 3), b1 (C_hid,), w2 (C_out, C_hid, 3, 3), b2 (C_out,).
    """
    n, c_in, h, w = x_nchw.shape
    c_hid = params["w1"].shape[0]
    c_out = params["w2"].shape[0]
    assert c_in == c_hid == params["w1"].shape[1] == params["w2"].shape[1]

    hp, wp = h + 2, w + 2                 # conv zero-padding of 1 per spatial side
    l_pix = hp * wp                       # flattened padded-pixel axis (324)
    lanes = _round_up(l_pix, 128)         # lane-dense pixel axis (384)
    c_in_p = _round_up(c_in, 8)           # 24
    c_hid_p = _round_up(c_hid, 8)         # 24
    c_out_p = _round_up(c_out, 8)         # 16

    # NCHW -> zero-padded grid on lanes; pad channels / lanes for dense vreg tiles.
    xg = jnp.pad(x_nchw.astype(jnp.float32),
                 ((0, 0), (0, c_in_p - c_in), (1, 1), (1, 1)))
    xg = xg.reshape(n, c_in_p, l_pix)
    xg = jnp.pad(xg, ((0, 0), (0, 0), (0, lanes - l_pix)))

    # Conv weights (O, I, 3, 3) -> (O_p, 9*I_p) slabs, tap-major / channel-minor K,
    # matching the tap-stack row order inside the kernel.
    def stack_w(wk, o_p, i_p):
        o, i = wk.shape[:2]
        wk = jnp.pad(wk.astype(jnp.float32),
                     ((0, o_p - o), (0, i_p - i), (0, 0), (0, 0)))
        return jnp.transpose(wk, (0, 2, 3, 1)).reshape(o_p, 9 * i_p)

    w1 = stack_w(params["w1"], c_hid_p, c_in_p)
    w2 = stack_w(params["w2"], c_out_p, c_hid_p)
    b1 = jnp.pad(params["b1"].astype(jnp.float32),
                 (0, c_hid_p - c_hid)).reshape(c_hid_p, 1)
    b2 = jnp.pad(params["b2"].astype(jnp.float32),
                 (0, c_out_p - c_out)).reshape(c_out_p, 1)

    kernel = functools.partial(_actionnet_kernel, wp=wp, hh=h, ww=w, lanes=lanes)

    flops = 2 * n * lanes * 9 * (c_hid_p * c_in_p + c_out_p * c_hid_p)
    bytes_accessed = 4 * (xg.size + n * c_out_p * lanes
                          + w1.size + w2.size + b1.size + b2.size)

    y_flat = pl.pallas_call(
        kernel,
        out_shape=jax.ShapeDtypeStruct((n, c_out_p, lanes), jnp.float32),
        grid_spec=pltpu.PrefetchScalarGridSpec(
            num_scalar_prefetch=0,
            grid=(n,),
            in_specs=[
                pl.BlockSpec((None, c_in_p, lanes), lambda i: (i, 0, 0)),   # x (per batch)
                pl.BlockSpec((c_hid_p, 9 * c_in_p), lambda i: (0, 0)),      # w1 slab
                pl.BlockSpec((c_hid_p, 1), lambda i: (0, 0)),               # b1
                pl.BlockSpec((c_out_p, 9 * c_hid_p), lambda i: (0, 0)),     # w2 slab
                pl.BlockSpec((c_out_p, 1), lambda i: (0, 0)),               # b2
            ],
            out_specs=pl.BlockSpec((None, c_out_p, lanes), lambda i: (i, 0, 0)),
        ),
        compiler_params=pltpu.CompilerParams(
            dimension_semantics=("parallel",),
        ),
        cost_estimate=pl.CostEstimate(
            flops=flops, transcendentals=0, bytes_accessed=bytes_accessed),
    )(xg, w1, b1, w2, b2)

    # Drop channel / lane pads and the padded-grid border.
    y = y_flat[:, :c_out, :l_pix].reshape(n, c_out, hp, wp)
    return y[:, :, 1:hp - 1, 1:wp - 1]


def init_params(key, c_hid=HIDDEN_DEPTH, c_out=OUT_CHANNELS):
    """PyTorch Conv2d default init: U(+-1/sqrt(fan_in)), fan_in = C_in*3*3."""
    ks = jax.random.split(key, 4)
    bound = 1.0 / jnp.sqrt(jnp.float32(c_hid * 3 * 3))
    u = lambda k, shape: jax.random.uniform(k, shape, jnp.float32, -bound, bound)
    return {
        "w1": u(ks[0], (c_hid, c_hid, 3, 3)),
        "b1": u(ks[1], (c_hid,)),
        "w2": u(ks[2], (c_out, c_hid, 3, 3)),
        "b2": u(ks[3], (c_out,)),
    }


def reference_forward(x_nchw, params):
    """Plain-JAX reference matching F.conv2d(kernel=3, padding=1) + ReLU semantics."""
    dn = ("NCHW", "OIHW", "NCHW")
    h = jax.lax.conv_general_dilated(
        x_nchw, params["w1"], window_strides=(1, 1), padding=((1, 1), (1, 1)),
        dimension_numbers=dn)
    h = jax.nn.relu(h + params["b1"].reshape(1, -1, 1, 1))
    y = jax.lax.conv_general_dilated(
        h, params["w2"], window_strides=(1, 1), padding=((1, 1), (1, 1)),
        dimension_numbers=dn)
    return jax.nn.relu(y + params["b2"].reshape(1, -1, 1, 1))


if __name__ == "__main__":
    key = jax.random.PRNGKey(0)
    k_x, k_p = jax.random.split(key)

    # ActionNet defaults: network_depth=1, hidden_depth=20, out_channels=11.
    x = jax.random.normal(k_x, (2, HIDDEN_DEPTH, 16, 16), jnp.float32)
    params = init_params(k_p)

    out = jax.jit(action_net_forward)(x, params)
    out = jax.block_until_ready(out)

    ref = reference_forward(x, params)
    assert out.shape == (2, OUT_CHANNELS, 16, 16)
    assert jnp.allclose(out, ref, atol=1e-3, rtol=1e-3)

    print("KERNEL_OK")
</pallas_src>

<mosaic_0001>
module attributes {stable_mosaic.version = 11 : i64} {
  func.func @_actionnet_kernel(%arg0: i32, %arg1: memref<1x24x384xf32, #tpu.memory_space<vmem>>, %arg2: memref<24x216xf32, #tpu.memory_space<vmem>>, %arg3: memref<24x1xf32, #tpu.memory_space<vmem>>, %arg4: memref<16x216xf32, #tpu.memory_space<vmem>>, %arg5: memref<16x1xf32, #tpu.memory_space<vmem>>, %arg6: memref<1x16x384xf32, #tpu.memory_space<vmem>>) attributes {dimension_semantics = [#tpu.dimension_semantics<parallel>], iteration_bounds = array<i64: 2>, scalar_prefetch = 0 : i64, scratch_operands = 0 : i64, tpu.core_type = #tpu.core_type<tc>, window_params = [{transform_indices = @transform_0, window_bounds = array<i64: 1, 24, 384>}, {pipeline_mode = #tpu.pipeline_mode<synchronous>, transform_indices = @transform_1, window_bounds = array<i64: 24, 216>}, {pipeline_mode = #tpu.pipeline_mode<synchronous>, transform_indices = @transform_2, window_bounds = array<i64: 24, 1>}, {pipeline_mode = #tpu.pipeline_mode<synchronous>, transform_indices = @transform_3, window_bounds = array<i64: 16, 216>}, {pipeline_mode = #tpu.pipeline_mode<synchronous>, transform_indices = @transform_4, window_bounds = array<i64: 16, 1>}, {transform_indices = @transform_5, window_bounds = array<i64: 1, 16, 384>}]} {
    %0 = tpu.iota {dimensions = array<i32: 1>} : vector<1x384xi32>
    %1 = arith.sitofp %0 : vector<1x384xi32> to vector<1x384xf32>
    %cst = arith.constant 5.000000e-01 : f32
    %2 = vector.broadcast %cst : f32 to vector<1x384xf32>
    %3 = arith.addf %1, %2 : vector<1x384xf32>
    %cst_0 = arith.constant 0.055555556 : f32
    %4 = vector.broadcast %cst_0 : f32 to vector<1x384xf32>
    %5 = arith.mulf %3, %4 : vector<1x384xf32>
    %6 = arith.fptosi %5 : vector<1x384xf32> to vector<1x384xi32>
    %c18_i32 = arith.constant 18 : i32
    %7 = vector.broadcast %c18_i32 : i32 to vector<1x384xi32>
    %8 = arith.muli %6, %7 : vector<1x384xi32>
    %9 = arith.subi %0, %8 : vector<1x384xi32>
    %c1_i32 = arith.constant 1 : i32
    %10 = vector.broadcast %c1_i32 : i32 to vector<1x384xi32>
    %11 = arith.cmpi sge, %6, %10 : vector<1x384xi32>
    %c16_i32 = arith.constant 16 : i32
    %12 = vector.broadcast %c16_i32 : i32 to vector<1x384xi32>
    %13 = arith.cmpi sle, %6, %12 : vector<1x384xi32>
    %14 = arith.andi %11, %13 : vector<1x384xi1>
    %c1_i32_1 = arith.constant 1 : i32
    %15 = vector.broadcast %c1_i32_1 : i32 to vector<1x384xi32>
    %16 = arith.cmpi sge, %9, %15 : vector<1x384xi32>
    %17 = arith.andi %14, %16 : vector<1x384xi1>
    %c16_i32_2 = arith.constant 16 : i32
    %18 = vector.broadcast %c16_i32_2 : i32 to vector<1x384xi32>
    %19 = arith.cmpi sle, %9, %18 : vector<1x384xi32>
    %20 = arith.andi %17, %19 : vector<1x384xi1>
    %cst_3 = arith.constant 1.000000e+00 : f32
    %cst_4 = arith.constant 0.000000e+00 : f32
    %21 = vector.broadcast %cst_3 : f32 to vector<1x384xf32>
    %22 = vector.broadcast %cst_4 : f32 to vector<1x384xf32>
    %23 = arith.select %20, %21, %22 : vector<1x384xi1>, vector<1x384xf32>
    %c0 = arith.constant 0 : index
    %c0_5 = arith.constant 0 : index
    %c0_6 = arith.constant 0 : index
    %24 = vector.load %arg1[%c0, %c0_5, %c0_6] : memref<1x24x384xf32, #tpu.memory_space<vmem>>, vector<1x24x384xf32>
    %25 = vector.shape_cast %24 : vector<1x24x384xf32> to vector<24x384xf32>
    %c0_7 = arith.constant 0 : index
    %c0_8 = arith.constant 0 : index
    %26 = vector.load %arg2[%c0_7, %c0_8] : memref<24x216xf32, #tpu.memory_space<vmem>>, vector<24x216xf32>
    %c19_i32 = arith.constant 19 : i32
    %27 = tpu.dynamic_rotate %25 by %c19_i32 dim 1 : vector<24x384xf32>, i32 -> vector<24x384xf32>
    %c18_i32_9 = arith.constant 18 : i32
    %28 = tpu.dynamic_rotate %25 by %c18_i32_9 dim 1 : vector<24x384xf32>, i32 -> vector<24x384xf32>
    %c17_i32 = arith.constant 17 : i32
    %29 = tpu.dynamic_rotate %25 by %c17_i32 dim 1 : vector<24x384xf32>, i32 -> vector<24x384xf32>
    %c1_i32_10 = arith.constant 1 : i32
    %30 = tpu.dynamic_rotate %25 by %c1_i32_10 dim 1 : vector<24x384xf32>, i32 -> vector<24x384xf32>
    %c383_i32 = arith.constant 383 : i32
    %31 = tpu.dynamic_rotate %25 by %c383_i32 dim 1 : vector<24x384xf32>, i32 -> vector<24x384xf32>
    %c367_i32 = arith.constant 367 : i32
    %32 = tpu.dynamic_rotate %25 by %c367_i32 dim 1 : vector<24x384xf32>, i32 -> vector<24x384xf32>
    %c366_i32 = arith.constant 366 : i32
    %33 = tpu.dynamic_rotate %25 by %c366_i32 dim 1 : vector<24x384xf32>, i32 -> vector<24x384xf32>
    %c365_i32 = arith.constant 365 : i32
    %34 = tpu.dynamic_rotate %25 by %c365_i32 dim 1 : vector<24x384xf32>, i32 -> vector<24x384xf32>
    %35 = tpu.concatenate %27, %28, %29, %30, %25, %31, %32, %33, %34 in 0 : vector<24x384xf32>, vector<24x384xf32>, vector<24x384xf32>, vector<24x384xf32>, vector<24x384xf32>, vector<24x384xf32>, vector<24x384xf32>, vector<24x384xf32>, vector<24x384xf32> -> vector<216x384xf32>
    %cst_11 = arith.constant dense<0.000000e+00> : vector<24x384xf32>
    %36 = tpu.matmul %26, %35, %cst_11 {dimension_numbers = #tpu.dot_dimension_numbers<[1], [0], [0], [1], [0, 0, 1, 1], [], []>} : vector<24x216xf32>, vector<216x384xf32>, vector<24x384xf32> -> vector<24x384xf32>
    %c0_12 = arith.constant 0 : index
    %c0_13 = arith.constant 0 : index
    %37 = vector.load %arg3[%c0_12, %c0_13] : memref<24x1xf32, #tpu.memory_space<vmem>>, vector<24x1xf32>
    %38 = vector.broadcast %37 : vector<24x1xf32> to vector<24x384xf32>
    %39 = arith.addf %36, %38 : vector<24x384xf32>
    %cst_14 = arith.constant 0.000000e+00 : f32
    %40 = vector.broadcast %cst_14 : f32 to vector<24x384xf32>
    %41 = arith.maximumf %39, %40 : vector<24x384xf32>
    %42 = vector.broadcast %23 : vector<1x384xf32> to vector<24x384xf32>
    %43 = arith.mulf %41, %42 : vector<24x384xf32>
    %c0_15 = arith.constant 0 : index
    %c0_16 = arith.constant 0 : index
    %44 = vector.load %arg4[%c0_15, %c0_16] : memref<16x216xf32, #tpu.memory_space<vmem>>, vector<16x216xf32>
    %c19_i32_17 = arith.constant 19 : i32
    %45 = tpu.dynamic_rotate %43 by %c19_i32_17 dim 1 : vector<24x384xf32>, i32 -> vector<24x384xf32>
    %c18_i32_18 = arith.constant 18 : i32
    %46 = tpu.dynamic_rotate %43 by %c18_i32_18 dim 1 : vector<24x384xf32>, i32 -> vector<24x384xf32>
    %c17_i32_19 = arith.constant 17 : i32
    %47 = tpu.dynamic_rotate %43 by %c17_i32_19 dim 1 : vector<24x384xf32>, i32 -> vector<24x384xf32>
    %c1_i32_20 = arith.constant 1 : i32
    %48 = tpu.dynamic_rotate %43 by %c1_i32_20 dim 1 : vector<24x384xf32>, i32 -> vector<24x384xf32>
    %c383_i32_21 = arith.constant 383 : i32
    %49 = tpu.dynamic_rotate %43 by %c383_i32_21 dim 1 : vector<24x384xf32>, i32 -> vector<24x384xf32>
    %c367_i32_22 = arith.constant 367 : i32
    %50 = tpu.dynamic_rotate %43 by %c367_i32_22 dim 1 : vector<24x384xf32>, i32 -> vector<24x384xf32>
    %c366_i32_23 = arith.constant 366 : i32
    %51 = tpu.dynamic_rotate %43 by %c366_i32_23 dim 1 : vector<24x384xf32>, i32 -> vector<24x384xf32>
    %c365_i32_24 = arith.constant 365 : i32
    %52 = tpu.dynamic_rotate %43 by %c365_i32_24 dim 1 : vector<24x384xf32>, i32 -> vector<24x384xf32>
    %53 = tpu.concatenate %45, %46, %47, %48, %43, %49, %50, %51, %52 in 0 : vector<24x384xf32>, vector<24x384xf32>, vector<24x384xf32>, vector<24x384xf32>, vector<24x384xf32>, vector<24x384xf32>, vector<24x384xf32>, vector<24x384xf32>, vector<24x384xf32> -> vector<216x384xf32>
    %cst_25 = arith.constant dense<0.000000e+00> : vector<16x384xf32>
    %54 = tpu.matmul %44, %53, %cst_25 {dimension_numbers = #tpu.dot_dimension_numbers<[1], [0], [0], [1], [0, 0, 1, 1], [], []>} : vector<16x216xf32>, vector<216x384xf32>, vector<16x384xf32> -> vector<16x384xf32>
    %c0_26 = arith.constant 0 : index
    %c0_27 = arith.constant 0 : index
    %55 = vector.load %arg5[%c0_26, %c0_27] : memref<16x1xf32, #tpu.memory_space<vmem>>, vector<16x1xf32>
    %56 = vector.broadcast %55 : vector<16x1xf32> to vector<16x384xf32>
    %57 = arith.addf %54, %56 : vector<16x384xf32>
    %cst_28 = arith.constant 0.000000e+00 : f32
    %58 = vector.broadcast %cst_28 : f32 to vector<16x384xf32>
    %59 = arith.maximumf %57, %58 : vector<16x384xf32>
    %c0_29 = arith.constant 0 : index
    %c0_30 = arith.constant 0 : index
    %c0_31 = arith.constant 0 : index
    %60 = vector.load %arg6[%c0_29, %c0_30, %c0_31] : memref<1x16x384xf32, #tpu.memory_space<vmem>>, vector<1x16x384xf32>
    %61 = vector.shape_cast %60 : vector<1x16x384xf32> to vector<16x384xf32>
    %62 = vector.shape_cast %59 : vector<16x384xf32> to vector<1x16x384xf32>
    tpu.vector_store %arg6[%c0_29, %c0_30, %c0_31], %62 {strides = array<i32>} : memref<1x16x384xf32, #tpu.memory_space<vmem>>, vector<1x16x384xf32>,
    return
  }
  func.func @transform_0(%arg0: i32) -> (i32, i32, i32) {
    %c0_i32 = arith.constant 0 : i32
    %c0_i32_0 = arith.constant 0 : i32
    %c0_i32_1 = arith.constant 0 : i32
    return %arg0, %c0_i32, %c0_i32_0 : i32, i32, i32
  }
  func.func @transform_1(%arg0: i32) -> (i32, i32) {
    %c0_i32 = arith.constant 0 : i32
    %c0_i32_0 = arith.constant 0 : i32
    %c0_i32_1 = arith.constant 0 : i32
    return %c0_i32, %c0_i32_0 : i32, i32
  }
  func.func @transform_2(%arg0: i32) -> (i32, i32) {
    %c0_i32 = arith.constant 0 : i32
    %c0_i32_0 = arith.constant 0 : i32
    %c0_i32_1 = arith.constant 0 : i32
    return %c0_i32, %c0_i32_0 : i32, i32
  }
  func.func @transform_3(%arg0: i32) -> (i32, i32) {
    %c0_i32 = arith.constant 0 : i32
    %c0_i32_0 = arith.constant 0 : i32
    %c0_i32_1 = arith.constant 0 : i32
    return %c0_i32, %c0_i32_0 : i32, i32
  }
  func.func @transform_4(%arg0: i32) -> (i32, i32) {
    %c0_i32 = arith.constant 0 : i32
    %c0_i32_0 = arith.constant 0 : i32
    %c0_i32_1 = arith.constant 0 : i32
    return %c0_i32, %c0_i32_0 : i32, i32
  }
  func.func @transform_5(%arg0: i32) -> (i32, i32, i32) {
    %c0_i32 = arith.constant 0 : i32
    %c0_i32_0 = arith.constant 0 : i32
    %c0_i32_1 = arith.constant 0 : i32
    return %arg0, %c0_i32, %c0_i32_0 : i32, i32, i32
  }
}

</mosaic_0001>

<llo_original>
// kernel: action_net_forward.1
$region0: #{action_net_forward.1}
  #allocation0 [shape = 'u32[]', space=smem, size = 0x4, offset = 0x4, fixed_abs, tag = 'smem constant byte address 0x4 - core index']
  #allocation1 [shape = 'u32[144,128]{1,0:T(1,128)}', space=vmem, size = 0x12000, scoped, tag = 'internal scratch']
  %s0 = inlined_call_operand.vmem [shape: f32[2,24,384], index: 0, kind: input, shape index: {}]
  %s1 = inlined_call_operand.vmem [shape: f32[24,216], index: 1, kind: input, shape index: {}]
  %s2 = inlined_call_operand.vmem [shape: f32[24,1], index: 2, kind: input, shape index: {}]
  %s3 = inlined_call_operand.vmem [shape: f32[16,216], index: 3, kind: input, shape index: {}]
  %s4 = inlined_call_operand.vmem [shape: f32[16,1], index: 4, kind: input, shape index: {}]
  %s5 = inlined_call_operand.vmem [shape: f32[2,16,384], index: 5, kind: output, shape index: {}]
  %s6 = sld [smem:[#allocation0]]
  $region53: #{action_net_forward.1} parent=0
    _
  %s8 = ssub.s32 1, %s6
  %s9 = scalar_select 0, %s8, %s6
  loop: start=0, step=1, limit=4
  $region2: #{action_net_forward.1} parent=0 // loop_pre_header
    _
  $region3: #{action_net_forward.1} parent=0 // loop_header
    %s11 = sphi 0, %s15
    %p12 = scmp.ge.s32.totalorder %s11, 4
    %s21 = sphi 0, %s23
    %s24 = sphi 0, %s21
    %s25 = sphi 0, %s24
    %s41 = sphi 0, %s25
    %s45 = sphi 0, %s45
    %s47 = sphi 0, %s45
    %s48 = sphi 0, %s47
    %s62 = sphi 0, %s48
    %s66 = sphi 0, %s66
    %s68 = sphi 0, %s66
    %s69 = sphi 0, %s68
    %s83 = sphi 0, %s69
    %s87 = sphi 0, %s87
    %s89 = sphi 0, %s87
    %s90 = sphi 0, %s89
    %s104 = sphi 0, %s90
    %s108 = sphi 0, %s108
    %s110 = sphi 0, %s108
    %s111 = sphi 0, %s110
    %s125 = sphi 0, %s111
    %s131 = sphi 0, %s133
    %s134 = sphi 0, %s131
    %s135 = sphi 0, %s134
    %s151 = sphi 0, %s135
  $region4: #{action_net_forward.1} parent=0 // loop_header_branch
    %14 = sbr.rel (%p12) target = $region8
  $region5: #{action_net_forward.1} parent=0 // loop_body
    %s16 = ssub.s32 %s11, 1
    %s17 = ssub.s32 %s11, 2
    %s18 = sadd.s32 %s11, 1
    %s19 = ssub.s32 %s11, %s18
    %p20 = scmp.eq.s32.totalorder %s19, 0
    %s22 = sadd.s32 %s21, 1
    %s23 = scalar_select %p20, %s21, %s22
    %p26 = pneg %p20
    %p27 = scmp.eq.s32.totalorder %s11, 1
    %p28 = por %p26, %p27
    %p29 = scmp.ne.s32.totalorder %s21, %s24
    %p30 = scmp.eq.s32.totalorder %s11, 0
    %p31 = por %p29, %p30
    %p32 = scmp.ne.s32.totalorder %s21, %s24
    %p33 = scmp.eq.s32.totalorder %s16, 1
    %p34 = por %p32, %p33
    %p35 = scmp.ne.s32.totalorder %s24, %s25
    %p36 = scmp.eq.s32.totalorder %s16, 0
    %p37 = por %p35, %p36
    %p38 = scmp.ne.s32.totalorder %s24, %s25
    %p39 = scmp.eq.s32.totalorder %s17, 1
    %p40 = por %p38, %p39
    %p42 = scmp.ne.s32.totalorder %s25, %s41
    %p43 = scmp.eq.s32.totalorder %s17, 0
    %p44 = por %p42, %p43
    %s46 = sadd.s32 %s45, 1
    %p49 = scmp.eq.s32.totalorder %s11, 1
    %p50 = scmp.ne.s32.totalorder %s45, %s47
    %p51 = scmp.eq.s32.totalorder %s11, 0
    %p52 = por %p50, %p51
    %p53 = scmp.ne.s32.totalorder %s45, %s47
    %p54 = scmp.eq.s32.totalorder %s16, 1
    %p55 = por %p53, %p54
    %p56 = scmp.ne.s32.totalorder %s47, %s48
    %p57 = scmp.eq.s32.totalorder %s16, 0
    %p58 = por %p56, %p57
    %p59 = scmp.ne.s32.totalorder %s47, %s48
    %p60 = scmp.eq.s32.totalorder %s17, 1
    %p61 = por %p59, %p60
    %p63 = scmp.ne.s32.totalorder %s48, %s62
    %p64 = scmp.eq.s32.totalorder %s17, 0
    %p65 = por %p63, %p64
    %s67 = sadd.s32 %s66, 1
    %p70 = scmp.eq.s32.totalorder %s11, 1
    %p71 = scmp.ne.s32.totalorder %s66, %s68
    %p72 = scmp.eq.s32.totalorder %s11, 0
    %p73 = por %p71, %p72
    %p74 = scmp.ne.s32.totalorder %s66, %s68
    %p75 = scmp.eq.s32.totalorder %s16, 1
    %p76 = por %p74, %p75
    %p77 = scmp.ne.s32.totalorder %s68, %s69
    %p78 = scmp.eq.s32.totalorder %s16, 0
    %p79 = por %p77, %p78
    %p80 = scmp.ne.s32.totalorder %s68, %s69
    %p81 = scmp.eq.s32.totalorder %s17, 1
    %p82 = por %p80, %p81
    %p84 = scmp.ne.s32.totalorder %s69, %s83
    %p85 = scmp.eq.s32.totalorder %s17, 0
    %p86 = por %p84, %p85
    %s88 = sadd.s32 %s87, 1
    %p91 = scmp.eq.s32.totalorder %s11, 1
    %p92 = scmp.ne.s32.totalorder %s87, %s89
    %p93 = scmp.eq.s32.totalorder %s11, 0
    %p94 = por %p92, %p93
    %p95 = scmp.ne.s32.totalorder %s87, %s89
    %p96 = scmp.eq.s32.totalorder %s16, 1
    %p97 = por %p95, %p96
    %p98 = scmp.ne.s32.totalorder %s89, %s90
    %p99 = scmp.eq.s32.totalorder %s16, 0
    %p100 = por %p98, %p99
    %p101 = scmp.ne.s32.totalorder %s89, %s90
    %p102 = scmp.eq.s32.totalorder %s17, 1
    %p103 = por %p101, %p102
    %p105 = scmp.ne.s32.totalorder %s90, %s104
    %p106 = scmp.eq.s32.totalorder %s17, 0
    %p107 = por %p105, %p106
    %s109 = sadd.s32 %s108, 1
    %p112 = scmp.eq.s32.totalorder %s11, 1
    %p113 = scmp.ne.s32.totalorder %s108, %s110
    %p114 = scmp.eq.s32.totalorder %s11, 0
    %p115 = por %p113, %p114
    %p116 = scmp.ne.s32.totalorder %s108, %s110
    %p117 = scmp.eq.s32.totalorder %s16, 1
    %p118 = por %p116, %p117
    %p119 = scmp.ne.s32.totalorder %s110, %s111
    %p120 = scmp.eq.s32.totalorder %s16, 0
    %p121 = por %p119, %p120
    %p122 = scmp.ne.s32.totalorder %s110, %s111
    %p123 = scmp.eq.s32.totalorder %s17, 1
    %p124 = por %p122, %p123
    %p126 = scmp.ne.s32.totalorder %s111, %s125
    %p127 = scmp.eq.s32.totalorder %s17, 0
    %p128 = por %p126, %p127
    %s129 = ssub.s32 %s11, %s18
    %p130 = scmp.eq.s32.totalorder %s129, 0
    %s132 = sadd.s32 %s131, 1
    %s133 = scalar_select %p130, %s131, %s132
    %p136 = pneg %p130
    %p137 = scmp.eq.s32.totalorder %s11, 1
    %p138 = por %p136, %p137
    %p139 = scmp.ne.s32.totalorder %s131, %s134
    %p140 = scmp.eq.s32.totalorder %s11, 0
    %p141 = por %p139, %p140
    %p142 = scmp.ne.s32.totalorder %s131, %s134
    %p143 = scmp.eq.s32.totalorder %s16, 1
    %p144 = por %p142, %p143
    %p145 = scmp.ne.s32.totalorder %s134, %s135
    %p146 = scmp.eq.s32.totalorder %s16, 0
    %p147 = por %p145, %p146
    %p148 = scmp.ne.s32.totalorder %s134, %s135
    %p149 = scmp.eq.s32.totalorder %s17, 1
    %p150 = por %p148, %p149
    %p152 = scmp.ne.s32.totalorder %s135, %s151
    %p153 = scmp.eq.s32.totalorder %s17, 0
    %p154 = por %p152, %p153
    %p155 = scmp.le.s32.totalorder 1, %s11
    %p156 = scmp.lt.s32.totalorder %s11, 3
    %p157 = pnand %p155, %p156
    %p158 = pneg %p157
    // Predicated region
    $region9: #{action_net_forward.1} parent=5 // pred_check
      _
    $region10: #{action_net_forward.1} parent=5 // pred_check_branch
      %160 = sbr.rel (%p157) target = $region12
    $region11: #{action_net_forward.1} parent=5 // pred_region
      %s161 = ssub.s32 %s11, 1
      // Predicated region
      $region13: #{action_net_forward.1} parent=11 // pred_check
        %p162 = pneg %p58
      $region14: #{action_net_forward.1} parent=11 // pred_check_branch
        %164 = sbr.rel (%p162) target = $region16
      $region15: #{action_net_forward.1} parent=11 // pred_region
        _
      $region16: #{action_net_forward.1} parent=11 // pred_fallthru
        _
      // Predicated region
      $region17: #{action_net_forward.1} parent=11 // pred_check
        %p165 = pneg %p79
      $region18: #{action_net_forward.1} parent=11 // pred_check_branch
        %167 = sbr.rel (%p165) target = $region20
      $region19: #{action_net_forward.1} parent=11 // pred_region
        _
      $region20: #{action_net_forward.1} parent=11 // pred_fallthru
        _
      // Predicated region
      $region21: #{action_net_forward.1} parent=11 // pred_check
        %p168 = pneg %p100
      $region22: #{action_net_forward.1} parent=11 // pred_check_branch
        %170 = sbr.rel (%p168) target = $region24
      $region23: #{action_net_forward.1} parent=11 // pred_region
        _
      $region24: #{action_net_forward.1} parent=11 // pred_fallthru
        _
      // Predicated region
      $region25: #{action_net_forward.1} parent=11 // pred_check
        %p171 = pneg %p121
      $region26: #{action_net_forward.1} parent=11 // pred_check_branch
        %173 = sbr.rel (%p171) target = $region28
      $region27: #{action_net_forward.1} parent=11 // pred_region
        _
      $region28: #{action_net_forward.1} parent=11 // pred_fallthru
        _
    $region12: #{action_net_forward.1} parent=5 // pred_fallthru
      _
    %p174 = scmp.lt.s32.totalorder %s11, 2
    // Predicated region
    $region29: #{action_net_forward.1} parent=5 // pred_check
      %p175 = pneg %p174
    $region30: #{action_net_forward.1} parent=5 // pred_check_branch
      %177 = sbr.rel (%p175) target = $region32
    $region31: #{action_net_forward.1} parent=5 // pred_region
      // Predicated region
      $region33: #{action_net_forward.1} parent=31 // pred_check
        %p178 = pneg %p31
      $region34: #{action_net_forward.1} parent=31 // pred_check_branch
        %180 = sbr.rel (%p178) target = $region36
      $region35: #{action_net_forward.1} parent=31 // pred_region
        %p181 = scmp.lt.s32.totalorder %s11, 1
        %s182 = scalar_select %p181, %s11, 1
        %s183 = smul.addr %s182, 9
        %s184 = smul.addr %s183, 8
        %s185 = scalar_lea.vmem %s0, %s184
      $region36: #{action_net_forward.1} parent=31 // pred_fallthru
        _
    $region32: #{action_net_forward.1} parent=5 // pred_fallthru
      _
    %p186 = scmp.le.s32.totalorder 1, %s11
    %p187 = scmp.lt.s32.totalorder %s11, 3
    %p188 = pnand %p186, %p187
    %p189 = pneg %p188
    // Predicated region
    $region37: #{action_net_forward.1} parent=5 // pred_check
      _
    $region38: #{action_net_forward.1} parent=5 // pred_check_branch
      %191 = sbr.rel (%p188) target = $region40
    $region39: #{action_net_forward.1} parent=5 // pred_region
      %s192 = ssub.s32 %s11, 1
      %p193 = scmp.lt.s32.totalorder %s16, 1
      %s194 = scalar_select %p193, %s16, 1
      %s195 = smul.addr %s194, 9
      %s196 = smul.addr %s195, 8
      %s197 = scalar_lea.vmem %s0, %s196
      %p198 = pneg %p37
      %p199 = pneg %p34
      %p200 = pneg %p58
      %p201 = pneg %p55
      %p202 = pneg %p79
      %p203 = pneg %p76
      %p204 = pneg %p100
      %p205 = pneg %p97
      %p206 = pneg %p121
      %p207 = pneg %p118
      %p208 = pneg %p147
      %p209 = pneg %p144
      %p210 = scmp.lt.s32.totalorder %s16, 1
      %s211 = scalar_select %p210, %s16, 1
      %s212 = smul.addr %s211, 6
      %s213 = smul.addr %s212, 8
      %s214 = scalar_lea.vmem %s5, %s213
      %p215 = scmp.lt.s32.totalorder %s16, 1
      %s216 = scalar_select %p215, %s16, 1
      %s217 = smul.addr %s216, 9
      %s218 = smul.addr %s217, 8
      %s219 = scalar_lea.vmem %s0, %s218
      %p220 = scmp.lt.s32.totalorder %s16, 1
      %s221 = scalar_select %p220, %s16, 1
      %s222 = smul.addr %s221, 6
      %s223 = smul.addr %s222, 8
      %s224 = scalar_lea.vmem %s5, %s223
      %v225 = vlaneseq
      %v226 = vand.u32 %v225, 127
      %v227 = vadd.s32 %v226, 128
      %v228 = vadd.s32 %v226, 256
      %v229 = vcvt.s32.f32 %v226
      %v230 = vcvt.s32.f32 %v227
      %v231 = vcvt.s32.f32 %v228
      %v232 = vadd.f32 %v229, 0.5
      %v233 = vadd.f32 %v230, 0.5
      %v234 = vadd.f32 %v231, 0.5
      %v235 = vmul.f32 %v232, 0.055555556
      %v236 = vmul.f32 %v233, 0.055555556
      %v237 = vmul.f32 %v234, 0.055555556
      %v238 = vcvt.f32.s32.to.zero.pseudo %v235
      %v239 = vcvt.f32.s32.to.zero.pseudo %v236
      %v240 = vcvt.f32.s32.to.zero.pseudo %v237
      %v241 = vmul.u32 %v238, 18
      %v242 = vmul.u32 %v239, 18
      %v243 = vmul.u32 %v240, 18
      %v244 = vsub.s32 %v226, %v241
      %v245 = vsub.s32 %v227, %v242
      %v246 = vsub.s32 %v228, %v243
      %vm247 = vcmp.ge.s32.totalorder %v238, 1
      %vm248 = vcmp.ge.s32.totalorder %v239, 1
      %vm249 = vcmp.ge.s32.totalorder %v240, 1
      %vm250 = vcmp.le.s32.totalorder %v238, 16
      %vm251 = vcmp.le.s32.totalorder %v239, 16
      %vm252 = vcmp.le.s32.totalorder %v240, 16
      %vm253 = vmand %vm247, %vm250
      %vm254 = vmand %vm248, %vm251
      %vm255 = vmand %vm249, %vm252
      %vm256 = vcmp.ge.s32.totalorder %v244, 1
      %vm257 = vcmp.ge.s32.totalorder %v245, 1
      %vm258 = vcmp.ge.s32.totalorder %v246, 1
      %vm259 = vmand %vm253, %vm256
      %vm260 = vmand %vm254, %vm257
      %vm261 = vmand %vm255, %vm258
      %vm262 = vcmp.le.s32.totalorder %v244, 16
      %vm263 = vcmp.le.s32.totalorder %v245, 16
      %vm264 = vcmp.le.s32.totalorder %v246, 16
      %vm265 = vmand %vm259, %vm262
      %vm266 = vmand %vm260, %vm263
      %vm267 = vmand %vm261, %vm264
      %v268 = vsel %vm265, 1.0, 0.0
      %v269 = vsel %vm266, 1.0, 0.0
      %v270 = vsel %vm267, 1.0, 0.0
      %v271 = vld [vmem:[%s219] sm:$0xff]
      %v272 = vld [vmem:[%s219 + $0x8] sm:$0xff]
      %v273 = vld [vmem:[%s219 + $0x10] sm:$0xff]
      %v274 = vld [vmem:[%s219 + $0x18] sm:$0xff]
      %v275 = vld [vmem:[%s219 + $0x20] sm:$0xff]
      %v276 = vld [vmem:[%s219 + $0x28] sm:$0xff]
      %v277 = vld [vmem:[%s219 + $0x30] sm:$0xff]
      %v278 = vld [vmem:[%s219 + $0x38] sm:$0xff]
      %v279 = vld [vmem:[%s219 + $0x40] sm:$0xff]
      %v280 = vld [vmem:[%s1] sm:$0xff]
      %v281 = vld [vmem:[%s1 + $0x8] sm:$0xff]
      %v282 = vld [vmem:[%s1 + $0x10] sm:$0xff]
      %v283 = vld [vmem:[%s1 + $0x18] sm:$0xff]
      %v284 = vld [vmem:[%s1 + $0x20] sm:$0xff]
      %v285 = vld [vmem:[%s1 + $0x28] sm:$0xff]
      %286 = vrot.lane.b32.xlu0 %v271, 19
      %v287 = vpop.permute.xlu0 %286
      %288 = vrot.lane.b32.xlu0 %v274, 19
      %v289 = vpop.permute.xlu0 %288
      %290 = vrot.lane.b32.xlu0 %v277, 19
      %v291 = vpop.permute.xlu0 %290
      %292 = vrot.lane.b32.xlu0 %v272, 19
      %v293 = vpop.permute.xlu0 %292
      %294 = vrot.lane.b32.xlu0 %v275, 19
      %v295 = vpop.permute.xlu0 %294
      %296 = vrot.lane.b32.xlu0 %v278, 19
      %v297 = vpop.permute.xlu0 %296
      %298 = vrot.lane.b32.xlu0 %v273, 19
      %v299 = vpop.permute.xlu0 %298
      %300 = vrot.lane.b32.xlu0 %v276, 19
      %v301 = vpop.permute.xlu0 %300
      %302 = vrot.lane.b32.xlu0 %v279, 19
      %v303 = vpop.permute.xlu0 %302
      %vm304 = vcmp.lt.s32.totalorder %v226, 19
      %v305 = vsel %vm304, %v293, %v299
      %v306 = vsel %vm304, %v295, %v301
      %v307 = vsel %vm304, %v297, %v303
      %v308 = vsel %vm304, %v287, %v293
      %v309 = vsel %vm304, %v289, %v295
      %v310 = vsel %vm304, %v291, %v297
      %v311 = vsel %vm304, %v299, %v287
      %v312 = vsel %vm304, %v301, %v289
      %v313 = vsel %vm304, %v303, %v291
      %314 = vrot.lane.b32.xlu0 %v271, 18
      %v315 = vpop.permute.xlu0 %314
      %316 = vrot.lane.b32.xlu0 %v274, 18
      %v317 = vpop.permute.xlu0 %316
      %318 = vrot.lane.b32.xlu0 %v277, 18
      %v319 = vpop.permute.xlu0 %318
      %320 = vrot.lane.b32.xlu0 %v272, 18
      %v321 = vpop.permute.xlu0 %320
      %322 = vrot.lane.b32.xlu0 %v275, 18
      %v323 = vpop.permute.xlu0 %322
      %324 = vrot.lane.b32.xlu0 %v278, 18
      %v325 = vpop.permute.xlu0 %324
      %326 = vrot.lane.b32.xlu0 %v273, 18
      %v327 = vpop.permute.xlu0 %326
      %328 = vrot.lane.b32.xlu0 %v276, 18
      %v329 = vpop.permute.xlu0 %328
      %330 = vrot.lane.b32.xlu0 %v279, 18
      %v331 = vpop.permute.xlu0 %330
      %vm332 = vcmp.lt.s32.totalorder %v226, 18
      %v333 = vsel %vm332, %v321, %v327
      %v334 = vsel %vm332, %v323, %v329
      %v335 = vsel %vm332, %v325, %v331
      %v336 = vsel %vm332, %v315, %v321
      %v337 = vsel %vm332, %v317, %v323
      %v338 = vsel %vm332, %v319, %v325
      %v339 = vsel %vm332, %v327, %v315
      %v340 = vsel %vm332, %v329, %v317
      %v341 = vsel %vm332, %v331, %v319
      %342 = vrot.lane.b32.xlu0 %v271, 17
      %v343 = vpop.permute.xlu0 %342
      %344 = vrot.lane.b32.xlu0 %v274, 17
      %v345 = vpop.permute.xlu0 %344
      %346 = vrot.lane.b32.xlu0 %v277, 17
      %v347 = vpop.permute.xlu0 %346
      %348 = vrot.lane.b32.xlu0 %v272, 17
      %v349 = vpop.permute.xlu0 %348
      %350 = vrot.lane.b32.xlu0 %v275, 17
      %v351 = vpop.permute.xlu0 %350
      %352 = vrot.lane.b32.xlu0 %v278, 17
      %v353 = vpop.permute.xlu0 %352
      %354 = vrot.lane.b32.xlu0 %v273, 17
      %v355 = vpop.permute.xlu0 %354
      %356 = vrot.lane.b32.xlu0 %v276, 17
      %v357 = vpop.permute.xlu0 %356
      %358 = vrot.lane.b32.xlu0 %v279, 17
      %v359 = vpop.permute.xlu0 %358
      %vm360 = vcmp.lt.s32.totalorder %v226, 17
      %v361 = vsel %vm360, %v349, %v355
      %v362 = vsel %vm360, %v351, %v357
      %v363 = vsel %vm360, %v353, %v359
      %v364 = vsel %vm360, %v343, %v349
      %v365 = vsel %vm360, %v345, %v351
      %v366 = vsel %vm360, %v347, %v353
      %v367 = vsel %vm360, %v355, %v343
      %v368 = vsel %vm360, %v357, %v345
      %v369 = vsel %vm360, %v359, %v347
      %370 = vrot.lane.b32.xlu0 %v271, 1
      %v371 = vpop.permute.xlu0 %370
      %372 = vrot.lane.b32.xlu0 %v274, 1
      %v373 = vpop.permute.xlu0 %372
      %374 = vrot.lane.b32.xlu0 %v277, 1
      %v375 = vpop.permute.xlu0 %374
      %376 = vrot.lane.b32.xlu0 %v272, 1
      %v377 = vpop.permute.xlu0 %376
      %378 = vrot.lane.b32.xlu0 %v275, 1
      %v379 = vpop.permute.xlu0 %378
      %380 = vrot.lane.b32.xlu0 %v278, 1
      %v381 = vpop.permute.xlu0 %380
      %382 = vrot.lane.b32.xlu0 %v273, 1
      %v383 = vpop.permute.xlu0 %382
      %384 = vrot.lane.b32.xlu0 %v276, 1
      %v385 = vpop.permute.xlu0 %384
      %386 = vrot.lane.b32.xlu0 %v279, 1
      %v387 = vpop.permute.xlu0 %386
      %vm388 = vcmp.lt.s32.totalorder %v226, 1
      %v389 = vsel %vm388, %v377, %v383
      %v390 = vsel %vm388, %v379, %v385
      %v391 = vsel %vm388, %v381, %v387
      %v392 = vsel %vm388, %v371, %v377
      %v393 = vsel %vm388, %v373, %v379
      %v394 = vsel %vm388, %v375, %v381
      %v395 = vsel %vm388, %v383, %v371
      %v396 = vsel %vm388, %v385, %v373
      %v397 = vsel %vm388, %v387, %v375
      %398 = vrot.lane.b32.xlu0 %v271, 127
      %v399 = vpop.permute.xlu0 %398
      %400 = vrot.lane.b32.xlu0 %v274, 127
      %v401 = vpop.permute.xlu0 %400
      %402 = vrot.lane.b32.xlu0 %v277, 127
      %v403 = vpop.permute.xlu0 %402
      %404 = vrot.lane.b32.xlu0 %v272, 127
      %v405 = vpop.permute.xlu0 %404
      %406 = vrot.lane.b32.xlu0 %v275, 127
      %v407 = vpop.permute.xlu0 %406
      %408 = vrot.lane.b32.xlu0 %v278, 127
      %v409 = vpop.permute.xlu0 %408
      %410 = vrot.lane.b32.xlu0 %v273, 127
      %v411 = vpop.permute.xlu0 %410
      %412 = vrot.lane.b32.xlu0 %v276, 127
      %v413 = vpop.permute.xlu0 %412
      %414 = vrot.lane.b32.xlu0 %v279, 127
      %v415 = vpop.permute.xlu0 %414
      %vm416 = vcmp.lt.s32.totalorder %v226, 127
      %v417 = vsel %vm416, %v405, %v411
      %v418 = vsel %vm416, %v407, %v413
      %v419 = vsel %vm416, %v409, %v415
      %v420 = vsel %vm416, %v399, %v405
      %v421 = vsel %vm416, %v401, %v407
      %v422 = vsel %vm416, %v403, %v409
      %v423 = vsel %vm416, %v411, %v399
      %v424 = vsel %vm416, %v413, %v401
      %v425 = vsel %vm416, %v415, %v403
      %426 = vrot.lane.b32.xlu0 %v271, 111
      %v427 = vpop.permute.xlu0 %426
      %428 = vrot.lane.b32.xlu0 %v274, 111
      %v429 = vpop.permute.xlu0 %428
      %430 = vrot.lane.b32.xlu0 %v277, 111
      %v431 = vpop.permute.xlu0 %430
      %432 = vrot.lane.b32.xlu0 %v272, 111
      %v433 = vpop.permute.xlu0 %432
      %434 = vrot.lane.b32.xlu0 %v275, 111
      %v435 = vpop.permute.xlu0 %434
      %436 = vrot.lane.b32.xlu0 %v278, 111
      %v437 = vpop.permute.xlu0 %436
      %438 = vrot.lane.b32.xlu0 %v273, 111
      %v439 = vpop.permute.xlu0 %438
      %440 = vrot.lane.b32.xlu0 %v276, 111
      %v441 = vpop.permute.xlu0 %440
      %442 = vrot.lane.b32.xlu0 %v279, 111
      %v443 = vpop.permute.xlu0 %442
      %vm444 = vcmp.lt.s32.totalorder %v226, 111
      %v445 = vsel %vm444, %v433, %v439
      %v446 = vsel %vm444, %v435, %v441
      %v447 = vsel %vm444, %v437, %v443
      %v448 = vsel %vm444, %v427, %v433
      %v449 = vsel %vm444, %v429, %v435
      %v450 = vsel %vm444, %v431, %v437
      %v451 = vsel %vm444, %v439, %v427
      %v452 = vsel %vm444, %v441, %v429
      %v453 = vsel %vm444, %v443, %v431
      %454 = vrot.lane.b32.xlu0 %v271, 110
      %v455 = vpop.permute.xlu0 %454
      %456 = vrot.lane.b32.xlu0 %v274, 110
      %v457 = vpop.permute.xlu0 %456
      %458 = vrot.lane.b32.xlu0 %v277, 110
      %v459 = vpop.permute.xlu0 %458
      %460 = vrot.lane.b32.xlu0 %v272, 110
      %v461 = vpop.permute.xlu0 %460
      %462 = vrot.lane.b32.xlu0 %v275, 110
      %v463 = vpop.permute.xlu0 %462
      %464 = vrot.lane.b32.xlu0 %v278, 110
      %v465 = vpop.permute.xlu0 %464
      %466 = vrot.lane.b32.xlu0 %v273, 110
      %v467 = vpop.permute.xlu0 %466
      %468 = vrot.lane.b32.xlu0 %v276, 110
      %v469 = vpop.permute.xlu0 %468
      %470 = vrot.lane.b32.xlu0 %v279, 110
      %v471 = vpop.permute.xlu0 %470
      %vm472 = vcmp.lt.s32.totalorder %v226, 110
      %v473 = vsel %vm472, %v461, %v467
      %v474 = vsel %vm472, %v463, %v469
      %v475 = vsel %vm472, %v465, %v471
      %v476 = vsel %vm472, %v455, %v461
      %v477 = vsel %vm472, %v457, %v463
      %v478 = vsel %vm472, %v459, %v465
      %v479 = vsel %vm472, %v467, %v455
      %v480 = vsel %vm472, %v469, %v457
      %v481 = vsel %vm472, %v471, %v459
      %482 = vrot.lane.b32.xlu0 %v271, 109
      %v483 = vpop.permute.xlu0 %482
      %484 = vrot.lane.b32.xlu0 %v274, 109
      %v485 = vpop.permute.xlu0 %484
      %486 = vrot.lane.b32.xlu0 %v277, 109
      %v487 = vpop.permute.xlu0 %486
      %488 = vrot.lane.b32.xlu0 %v272, 109
      %v489 = vpop.permute.xlu0 %488
      %490 = vrot.lane.b32.xlu0 %v275, 109
      %v491 = vpop.permute.xlu0 %490
      %492 = vrot.lane.b32.xlu0 %v278, 109
      %v493 = vpop.permute.xlu0 %492
      %494 = vrot.lane.b32.xlu0 %v273, 109
      %v495 = vpop.permute.xlu0 %494
      %496 = vrot.lane.b32.xlu0 %v276, 109
      %v497 = vpop.permute.xlu0 %496
      %498 = vrot.lane.b32.xlu0 %v279, 109
      %v499 = vpop.permute.xlu0 %498
      %vm500 = vcmp.lt.s32.totalorder %v226, 109
      %v501 = vsel %vm500, %v489, %v495
      %v502 = vsel %vm500, %v491, %v497
      %v503 = vsel %vm500, %v493, %v499
      %v504 = vsel %vm500, %v483, %v489
      %v505 = vsel %vm500, %v485, %v491
      %v506 = vsel %vm500, %v487, %v493
      %v507 = vsel %vm500, %v495, %v483
      %v508 = vsel %vm500, %v497, %v485
      %v509 = vsel %vm500, %v499, %v487
      %v510 = vld [vmem:[%s2] sm:$0xff]
      %v511 = vld [vmem:[%s2 + $0x8] sm:$0xff]
      %v512 = vld [vmem:[%s2 + $0x10] sm:$0xff]
      %514 = vset.pattern.permute.xlu0 0
      %515 = vperm.xlu0 %514, %v510
      %v516 = vpop.permute.xlu0 %515
      %519 = vset.pattern.permute.xlu0 0
      %520 = vperm.xlu0 %519, %v511
      %v521 = vpop.permute.xlu0 %520
      %524 = vset.pattern.permute.xlu0 0
      %525 = vperm.xlu0 %524, %v512
      %v526 = vpop.permute.xlu0 %525
      %vm528 = vcmask 719872
      %v530 = vsel %vm528, %v281, 0
      %v533 = vsel %vm528, %v283, 0
      %v536 = vsel %vm528, %v285, 0
      %538 = vmatprep.subr.mxu0 %v308
      %539 = vmatpush1.msra.mxu0 %v311
      %540 = vmatprep.subr.mxu0 %v309
      %541 = vmatpush1.msra.mxu0 %v312
      %542 = vmatprep.subr.mxu0 %v310
      %543 = vmatpush1.msra.mxu0 %v313
      %544 = vmatprep.subr.mxu0 %v336
      %545 = vmatpush1.msra.mxu0 %v339
      %546 = vmatprep.subr.mxu0 %v337
      %547 = vmatpush1.msra.mxu0 %v340
      %548 = vmatprep.subr.mxu0 %v338
      %549 = vmatpush1.msra.mxu0 %v341
      %550 = vmatprep.subr.mxu0 %v364
      %551 = vmatpush1.msra.mxu0 %v367
      %552 = vmatprep.subr.mxu0 %v365
      %553 = vmatpush1.msra.mxu0 %v368
      %554 = vmatprep.subr.mxu0 %v366
      %555 = vmatpush1.msra.mxu0 %v369
      %556 = vmatprep.subr.mxu0 %v392
      %557 = vmatpush1.msra.mxu0 %v395
      %558 = vmatprep.subr.mxu0 %v393
      %559 = vmatpush1.msra.mxu0 %v396
      %560 = vmatprep.subr.mxu0 %v394
      %561 = vmatpush1.msra.mxu0 %v397
      %562 = vmatprep.subr.mxu0 %v272
      %563 = vmatpush1.msra.mxu0 %v271
      %564 = vmatprep.subr.mxu0 %v275
      %565 = vmatpush1.msra.mxu0 %v274
      %566 = vmatprep.subr.mxu0 %v278
      %567 = vmatpush1.msra.mxu0 %v277
      %568 = vmatprep.subr.mxu0 %v417
      %569 = vmatpush1.msra.mxu0 %v420
      %570 = vmatprep.subr.mxu0 %v418
      %571 = vmatpush1.msra.mxu0 %v421
      %572 = vmatprep.subr.mxu0 %v419
      %573 = vmatpush1.msra.mxu0 %v422
      %574 = vmatprep.subr.mxu0 %v445
      %575 = vmatpush1.msra.mxu0 %v448
      %576 = vmatprep.subr.mxu0 %v446
      %577 = vmatpush1.msra.mxu0 %v449
      %578 = vmatprep.subr.mxu0 %v447
      %579 = vmatpush1.msra.mxu0 %v450
      %580 = vmatprep.subr.mxu0 %v473
      %581 = vmatpush1.msra.mxu0 %v476
      %582 = vmatprep.subr.mxu0 %v474
      %583 = vmatpush1.msra.mxu0 %v477
      %584 = vmatprep.subr.mxu0 %v475
      %585 = vmatpush1.msra.mxu0 %v478
      %586 = vmatprep.subr.mxu0 %v501
      %587 = vmatpush1.msra.mxu0 %v504
      %588 = vmatprep.subr.mxu0 %v502
      %589 = vmatpush1.msra.mxu0 %v505
      %590 = vmatprep.subr.mxu0 %v503
      %591 = vmatpush1.msra.mxu0 %v506
      %592 = vmatprep.subr.mxu0 0.0
      %593 = vmatpush1.msra.mxu0 0.0
      %594 = vmatprep.subr.mxu0 0.0
      %595 = vmatpush1.msra.mxu0 0.0
      %596 = vmatprep.subr.mxu0 0.0
      %597 = vmatpush1.msra.mxu0 0.0
      %598 = vmatprep.subr.mxu0 0.0
      %599 = vmatpush1.msra.mxu0 0.0
      %600 = vmatprep.subr.mxu0 0.0
      %601 = vmatpush1.msra.mxu0 0.0
      %602 = vmatprep.mubr.f32.mxu0 %v530
      %603 = vmatmul.mubr.f32.gmra.mrb[0].mxu0 %v280
      %v604 = vpop.f32.mrb[0].mxu0
      %v605 = vadd.f32 %v516, %v604
      %v606 = vpop.f32.mrb[0].mxu0
      %v607 = vadd.f32 %v516, %v606
      %608 = vmatprep.mubr.f32.mxu0 %v533
      %609 = vmatmul.mubr.f32.gmra.mrb[0].mxu0 %v282
      %v610 = vpop.f32.mrb[0].mxu0
      %v611 = vadd.f32 %v521, %v610
      %v612 = vpop.f32.mrb[0].mxu0
      %v613 = vadd.f32 %v521, %v612
      %614 = vmatprep.mubr.f32.mxu0 %v536
      %615 = vmatmul.mubr.f32.gmra.mrb[0].mxu0 %v284
      %v616 = vpop.f32.mrb[0].mxu0
      %v617 = vadd.f32 %v526, %v616
      %v618 = vpop.f32.mrb[0].mxu0
      %v619 = vadd.f32 %v526, %v618
      %620 = vdwg.mxu0
      %621 = vmatprep.subr.mxu0 0.0
      %622 = vmatpush1.msra.mxu0 %v305
      %623 = vmatprep.subr.mxu0 0.0
      %624 = vmatpush1.msra.mxu0 %v306
      %625 = vmatprep.subr.mxu0 0.0
      %626 = vmatpush1.msra.mxu0 %v307
      %627 = vmatprep.subr.mxu0 0.0
      %628 = vmatpush1.msra.mxu0 %v333
      %629 = vmatprep.subr.mxu0 0.0
      %630 = vmatpush1.msra.mxu0 %v334
      %631 = vmatprep.subr.mxu0 0.0
      %632 = vmatpush1.msra.mxu0 %v335
      %633 = vmatprep.subr.mxu0 0.0
      %634 = vmatpush1.msra.mxu0 %v361
      %635 = vmatprep.subr.mxu0 0.0
      %636 = vmatpush1.msra.mxu0 %v362
      %637 = vmatprep.subr.mxu0 0.0
      %638 = vmatpush1.msra.mxu0 %v363
      %639 = vmatprep.subr.mxu0 0.0
      %640 = vmatpush1.msra.mxu0 %v389
      %641 = vmatprep.subr.mxu0 0.0
      %642 = vmatpush1.msra.mxu0 %v390
      %643 = vmatprep.subr.mxu0 0.0
      %644 = vmatpush1.msra.mxu0 %v391
      %645 = vmatprep.subr.mxu0 0.0
      %646 = vmatpush1.msra.mxu0 %v273
      %647 = vmatprep.subr.mxu0 0.0
      %648 = vmatpush1.msra.mxu0 %v276
      %649 = vmatprep.subr.mxu0 0.0
      %650 = vmatpush1.msra.mxu0 %v279
      %651 = vmatprep.subr.mxu0 0.0
      %652 = vmatpush1.msra.mxu0 %v423
      %653 = vmatprep.subr.mxu0 0.0
      %654 = vmatpush1.msra.mxu0 %v424
      %655 = vmatprep.subr.mxu0 0.0
      %656 = vmatpush1.msra.mxu0 %v425
      %657 = vmatprep.subr.mxu0 0.0
      %658 = vmatpush1.msra.mxu0 %v451
      %659 = vmatprep.subr.mxu0 0.0
      %660 = vmatpush1.msra.mxu0 %v452
      %661 = vmatprep.subr.mxu0 0.0
      %662 = vmatpush1.msra.mxu0 %v453
      %663 = vmatprep.subr.mxu0 0.0
      %664 = vmatpush1.msra.mxu0 %v479
      %665 = vmatprep.subr.mxu0 0.0
      %666 = vmatpush1.msra.mxu0 %v480
      %667 = vmatprep.subr.mxu0 0.0
      %668 = vmatpush1.msra.mxu0 %v481
      %669 = vmatprep.subr.mxu0 0.0
      %670 = vmatpush1.msra.mxu0 %v507
      %671 = vmatprep.subr.mxu0 0.0
      %672 = vmatpush1.msra.mxu0 %v508
      %673 = vmatprep.subr.mxu0 0.0
      %674 = vmatpush1.msra.mxu0 %v509
      %675 = vmatprep.subr.mxu0 0.0
      %676 = vmatpush1.msra.mxu0 0.0
      %677 = vmatprep.subr.mxu0 0.0
      %678 = vmatpush1.msra.mxu0 0.0
      %679 = vmatprep.subr.mxu0 0.0
      %680 = vmatpush1.msra.mxu0 0.0
      %681 = vmatprep.subr.mxu0 0.0
      %682 = vmatpush1.msra.mxu0 0.0
      %683 = vmatprep.subr.mxu0 0.0
      %684 = vmatpush1.msra.mxu0 0.0
      %685 = vmatprep.mubr.f32.mxu0 %v530
      %686 = vmatmul.mubr.f32.gmra.mrb[0].mxu0 %v280
      %v687 = vpop.f32.mrb[0].mxu0
      %v688 = vadd.f32 %v516, %v687
      %v689 = vpop.f32.mrb[0].mxu0
      %690 = vmatprep.mubr.f32.mxu0 %v533
      %691 = vmatmul.mubr.f32.gmra.mrb[0].mxu0 %v282
      %v692 = vpop.f32.mrb[0].mxu0
      %v693 = vadd.f32 %v521, %v692
      %v694 = vpop.f32.mrb[0].mxu0
      %695 = vmatprep.mubr.f32.mxu0 %v536
      %696 = vmatmul.mubr.f32.gmra.mrb[0].mxu0 %v284
      %v697 = vpop.f32.mrb[0].mxu0
      %v698 = vadd.f32 %v526, %v697
      %v699 = vpop.f32.mrb[0].mxu0
      %700 = vdwg.mxu0
      %v701 = vmax.f32 %v605, 0.0
      %v702 = vmax.f32 %v607, 0.0
      %v703 = vmax.f32 %v688, 0.0
      %v704 = vmax.f32 %v611, 0.0
      %v705 = vmax.f32 %v613, 0.0
      %v706 = vmax.f32 %v693, 0.0
      %v707 = vmax.f32 %v617, 0.0
      %v708 = vmax.f32 %v619, 0.0
      %v709 = vmax.f32 %v698, 0.0
      %v710 = vmul.f32 %v701, %v268
      %v711 = vmul.f32 %v702, %v269
      %v712 = vmul.f32 %v703, %v270
      %v713 = vmul.f32 %v704, %v268
      %v714 = vmul.f32 %v705, %v269
      %v715 = vmul.f32 %v706, %v270
      %v716 = vmul.f32 %v707, %v268
      %v717 = vmul.f32 %v708, %v269
      %v718 = vmul.f32 %v709, %v270
      %v719 = vld [vmem:[%s3] sm:$0xff]
      %v720 = vld [vmem:[%s3 + $0x8] sm:$0xff]
      %v721 = vld [vmem:[%s3 + $0x10] sm:$0xff]
      %v722 = vld [vmem:[%s3 + $0x18] sm:$0xff]
      %723 = vrot.lane.b32.xlu0 %v710, 19
      %v724 = vpop.permute.xlu0 %723
      %725 = vrot.lane.b32.xlu0 %v713, 19
      %v726 = vpop.permute.xlu0 %725
      %727 = vrot.lane.b32.xlu0 %v716, 19
      %v728 = vpop.permute.xlu0 %727
      %729 = vrot.lane.b32.xlu0 %v711, 19
      %v730 = vpop.permute.xlu0 %729
      %731 = vrot.lane.b32.xlu0 %v714, 19
      %v732 = vpop.permute.xlu0 %731
      %733 = vrot.lane.b32.xlu0 %v717, 19
      %v734 = vpop.permute.xlu0 %733
      %735 = vrot.lane.b32.xlu0 %v712, 19
      %v736 = vpop.permute.xlu0 %735
      %737 = vrot.lane.b32.xlu0 %v715, 19
      %v738 = vpop.permute.xlu0 %737
      %739 = vrot.lane.b32.xlu0 %v718, 19
      %v740 = vpop.permute.xlu0 %739
      %v741 = vsel %vm304, %v730, %v736
      %v742 = vsel %vm304, %v732, %v738
      %v743 = vsel %vm304, %v734, %v740
      %v744 = vsel %vm304, %v724, %v730
      %v745 = vsel %vm304, %v726, %v732
      %v746 = vsel %vm304, %v728, %v734
      %v747 = vsel %vm304, %v736, %v724
      %v748 = vsel %vm304, %v738, %v726
      %v749 = vsel %vm304, %v740, %v728
      %750 = vrot.lane.b32.xlu0 %v710, 18
      %v751 = vpop.permute.xlu0 %750
      %752 = vrot.lane.b32.xlu0 %v713, 18
      %v753 = vpop.permute.xlu0 %752
      %754 = vrot.lane.b32.xlu0 %v716, 18
      %v755 = vpop.permute.xlu0 %754
      %756 = vrot.lane.b32.xlu0 %v711, 18
      %v757 = vpop.permute.xlu0 %756
      %758 = vrot.lane.b32.xlu0 %v714, 18
      %v759 = vpop.permute.xlu0 %758
      %760 = vrot.lane.b32.xlu0 %v717, 18
      %v761 = vpop.permute.xlu0 %760
      %762 = vrot.lane.b32.xlu0 %v712, 18
      %v763 = vpop.permute.xlu0 %762
      %764 = vrot.lane.b32.xlu0 %v715, 18
      %v765 = vpop.permute.xlu0 %764
      %766 = vrot.lane.b32.xlu0 %v718, 18
      %v767 = vpop.permute.xlu0 %766
      %v768 = vsel %vm332, %v757, %v763
      %v769 = vsel %vm332, %v759, %v765
      %v770 = vsel %vm332, %v761, %v767
      %v771 = vsel %vm332, %v751, %v757
      %v772 = vsel %vm332, %v753, %v759
      %v773 = vsel %vm332, %v755, %v761
      %v774 = vsel %vm332, %v763, %v751
      %v775 = vsel %vm332, %v765, %v753
      %v776 = vsel %vm332, %v767, %v755
      %777 = vrot.lane.b32.xlu0 %v710, 17
      %v778 = vpop.permute.xlu0 %777
      %779 = vrot.lane.b32.xlu0 %v713, 17
      %v780 = vpop.permute.xlu0 %779
      %781 = vrot.lane.b32.xlu0 %v716, 17
      %v782 = vpop.permute.xlu0 %781
      %783 = vrot.lane.b32.xlu0 %v711, 17
      %v784 = vpop.permute.xlu0 %783
      %785 = vrot.lane.b32.xlu0 %v714, 17
      %v786 = vpop.permute.xlu0 %785
      %787 = vrot.lane.b32.xlu0 %v717, 17
      %v788 = vpop.permute.xlu0 %787
      %789 = vrot.lane.b32.xlu0 %v712, 17
      %v790 = vpop.permute.xlu0 %789
      %791 = vrot.lane.b32.xlu0 %v715, 17
      %v792 = vpop.permute.xlu0 %791
      %793 = vrot.lane.b32.xlu0 %v718, 17
      %v794 = vpop.permute.xlu0 %793
      %v795 = vsel %vm360, %v784, %v790
      %v796 = vsel %vm360, %v786, %v792
      %v797 = vsel %vm360, %v788, %v794
      %v798 = vsel %vm360, %v778, %v784
      %v799 = vsel %vm360, %v780, %v786
      %v800 = vsel %vm360, %v782, %v788
      %v801 = vsel %vm360, %v790, %v778
      %v802 = vsel %vm360, %v792, %v780
      %v803 = vsel %vm360, %v794, %v782
      %804 = vrot.lane.b32.xlu0 %v710, 1
      %v805 = vpop.permute.xlu0 %804
      %806 = vrot.lane.b32.xlu0 %v713, 1
      %v807 = vpop.permute.xlu0 %806
      %808 = vrot.lane.b32.xlu0 %v716, 1
      %v809 = vpop.permute.xlu0 %808
      %810 = vrot.lane.b32.xlu0 %v711, 1
      %v811 = vpop.permute.xlu0 %810
      %812 = vrot.lane.b32.xlu0 %v714, 1
      %v813 = vpop.permute.xlu0 %812
      %814 = vrot.lane.b32.xlu0 %v717, 1
      %v815 = vpop.permute.xlu0 %814
      %816 = vrot.lane.b32.xlu0 %v712, 1
      %v817 = vpop.permute.xlu0 %816
      %818 = vrot.lane.b32.xlu0 %v715, 1
      %v819 = vpop.permute.xlu0 %818
      %820 = vrot.lane.b32.xlu0 %v718, 1
      %v821 = vpop.permute.xlu0 %820
      %v822 = vsel %vm388, %v811, %v817
      %v823 = vsel %vm388, %v813, %v819
      %v824 = vsel %vm388, %v815, %v821
      %v825 = vsel %vm388, %v805, %v811
      %v826 = vsel %vm388, %v807, %v813
      %v827 = vsel %vm388, %v809, %v815
      %v828 = vsel %vm388, %v817, %v805
      %v829 = vsel %vm388, %v819, %v807
      %v830 = vsel %vm388, %v821, %v809
      %831 = vrot.lane.b32.xlu0 %v710, 127
      %v832 = vpop.permute.xlu0 %831
      %833 = vrot.lane.b32.xlu0 %v713, 127
      %v834 = vpop.permute.xlu0 %833
      %835 = vrot.lane.b32.xlu0 %v716, 127
      %v836 = vpop.permute.xlu0 %835
      %837 = vrot.lane.b32.xlu0 %v711, 127
      %v838 = vpop.permute.xlu0 %837
      %839 = vrot.lane.b32.xlu0 %v714, 127
      %v840 = vpop.permute.xlu0 %839
      %841 = vrot.lane.b32.xlu0 %v717, 127
      %v842 = vpop.permute.xlu0 %841
      %843 = vrot.lane.b32.xlu0 %v712, 127
      %v844 = vpop.permute.xlu0 %843
      %845 = vrot.lane.b32.xlu0 %v715, 127
      %v846 = vpop.permute.xlu0 %845
      %847 = vrot.lane.b32.xlu0 %v718, 127
      %v848 = vpop.permute.xlu0 %847
      %v849 = vsel %vm416, %v838, %v844
      %v850 = vsel %vm416, %v840, %v846
      %v851 = vsel %vm416, %v842, %v848
      %v852 = vsel %vm416, %v832, %v838
      %v853 = vsel %vm416, %v834, %v840
      %v854 = vsel %vm416, %v836, %v842
      %v855 = vsel %vm416, %v844, %v832
      %v856 = vsel %vm416, %v846, %v834
      %v857 = vsel %vm416, %v848, %v836
      %858 = vrot.lane.b32.xlu0 %v710, 111
      %v859 = vpop.permute.xlu0 %858
      %860 = vrot.lane.b32.xlu0 %v713, 111
      %v861 = vpop.permute.xlu0 %860
      %862 = vrot.lane.b32.xlu0 %v716, 111
      %v863 = vpop.permute.xlu0 %862
      %864 = vrot.lane.b32.xlu0 %v711, 111
      %v865 = vpop.permute.xlu0 %864
      %866 = vrot.lane.b32.xlu0 %v714, 111
      %v867 = vpop.permute.xlu0 %866
      %868 = vrot.lane.b32.xlu0 %v717, 111
      %v869 = vpop.permute.xlu0 %868
      %870 = vrot.lane.b32.xlu0 %v712, 111
      %v871 = vpop.permute.xlu0 %870
      %872 = vrot.lane.b32.xlu0 %v715, 111
      %v873 = vpop.permute.xlu0 %872
      %874 = vrot.lane.b32.xlu0 %v718, 111
      %v875 = vpop.permute.xlu0 %874
      %v876 = vsel %vm444, %v865, %v871
      %v877 = vsel %vm444, %v867, %v873
      %v878 = vsel %vm444, %v869, %v875
      %v879 = vsel %vm444, %v859, %v865
      %v880 = vsel %vm444, %v861, %v867
      %v881 = vsel %vm444, %v863, %v869
      %v882 = vsel %vm444, %v871, %v859
      %v883 = vsel %vm444, %v873, %v861
      %v884 = vsel %vm444, %v875, %v863
      %885 = vrot.lane.b32.xlu0 %v710, 110
      %v886 = vpop.permute.xlu0 %885
      %887 = vrot.lane.b32.xlu0 %v713, 110
      %v888 = vpop.permute.xlu0 %887
      %889 = vrot.lane.b32.xlu0 %v716, 110
      %v890 = vpop.permute.xlu0 %889
      %891 = vrot.lane.b32.xlu0 %v711, 110
      %v892 = vpop.permute.xlu0 %891
      %893 = vrot.lane.b32.xlu0 %v714, 110
      %v894 = vpop.permute.xlu0 %893
      %895 = vrot.lane.b32.xlu0 %v717, 110
      %v896 = vpop.permute.xlu0 %895
      %897 = vrot.lane.b32.xlu0 %v712, 110
      %v898 = vpop.permute.xlu0 %897
      %899 = vrot.lane.b32.xlu0 %v715, 110
      %v900 = vpop.permute.xlu0 %899
      %901 = vrot.lane.b32.xlu0 %v718, 110
      %v902 = vpop.permute.xlu0 %901
      %v903 = vsel %vm472, %v892, %v898
      %v904 = vsel %vm472, %v894, %v900
      %v905 = vsel %vm472, %v896, %v902
      %v906 = vsel %vm472, %v886, %v892
      %v907 = vsel %vm472, %v888, %v894
      %v908 = vsel %vm472, %v890, %v896
      %v909 = vsel %vm472, %v898, %v886
      %v910 = vsel %vm472, %v900, %v888
      %v911 = vsel %vm472, %v902, %v890
      %912 = vrot.lane.b32.xlu0 %v710, 109
      %v913 = vpop.permute.xlu0 %912
      %914 = vrot.lane.b32.xlu0 %v713, 109
      %v915 = vpop.permute.xlu0 %914
      %916 = vrot.lane.b32.xlu0 %v716, 109
      %v917 = vpop.permute.xlu0 %916
      %918 = vrot.lane.b32.xlu0 %v711, 109
      %v919 = vpop.permute.xlu0 %918
      %920 = vrot.lane.b32.xlu0 %v714, 109
      %v921 = vpop.permute.xlu0 %920
      %922 = vrot.lane.b32.xlu0 %v717, 109
      %v923 = vpop.permute.xlu0 %922
      %924 = vrot.lane.b32.xlu0 %v712, 109
      %v925 = vpop.permute.xlu0 %924
      %926 = vrot.lane.b32.xlu0 %v715, 109
      %v927 = vpop.permute.xlu0 %926
      %928 = vrot.lane.b32.xlu0 %v718, 109
      %v929 = vpop.permute.xlu0 %928
      %v930 = vsel %vm500, %v919, %v925
      %v931 = vsel %vm500, %v921, %v927
      %v932 = vsel %vm500, %v923, %v929
      %v933 = vsel %vm500, %v913, %v919
      %v934 = vsel %vm500, %v915, %v921
      %v935 = vsel %vm500, %v917, %v923
      %v936 = vsel %vm500, %v925, %v913
      %v937 = vsel %vm500, %v927, %v915
      %v938 = vsel %vm500, %v929, %v917
      %v939 = vld [vmem:[%s4] sm:$0xff]
      %v940 = vld [vmem:[%s4 + $0x8] sm:$0xff]
      %942 = vset.pattern.permute.xlu0 0
      %943 = vperm.xlu0 %942, %v939
      %v944 = vpop.permute.xlu0 %943
      %947 = vset.pattern.permute.xlu0 0
      %948 = vperm.xlu0 %947, %v940
      %v949 = vpop.permute.xlu0 %948
      %v952 = vsel %vm528, %v720, 0
      %v955 = vsel %vm528, %v722, 0
      %957 = vmatprep.subr.mxu0 %v744
      %958 = vmatpush1.msra.mxu0 %v747
      %959 = vmatprep.subr.mxu0 %v745
      %960 = vmatpush1.msra.mxu0 %v748
      %961 = vmatprep.subr.mxu0 %v746
      %962 = vmatpush1.msra.mxu0 %v749
      %963 = vmatprep.subr.mxu0 %v771
      %964 = vmatpush1.msra.mxu0 %v774
      %965 = vmatprep.subr.mxu0 %v772
      %966 = vmatpush1.msra.mxu0 %v775
      %967 = vmatprep.subr.mxu0 %v773
      %968 = vmatpush1.msra.mxu0 %v776
      %969 = vmatprep.subr.mxu0 %v798
      %970 = vmatpush1.msra.mxu0 %v801
      %971 = vmatprep.subr.mxu0 %v799
      %972 = vmatpush1.msra.mxu0 %v802
      %973 = vmatprep.subr.mxu0 %v800
      %974 = vmatpush1.msra.mxu0 %v803
      %975 = vmatprep.subr.mxu0 %v825
      %976 = vmatpush1.msra.mxu0 %v828
      %977 = vmatprep.subr.mxu0 %v826
      %978 = vmatpush1.msra.mxu0 %v829
      %979 = vmatprep.subr.mxu0 %v827
      %980 = vmatpush1.msra.mxu0 %v830
      %981 = vmatprep.subr.mxu0 %v711
      %982 = vmatpush1.msra.mxu0 %v710
      %983 = vmatprep.subr.mxu0 %v714
      %984 = vmatpush1.msra.mxu0 %v713
      %985 = vmatprep.subr.mxu0 %v717
      %986 = vmatpush1.msra.mxu0 %v716
      %987 = vmatprep.subr.mxu0 %v849
      %988 = vmatpush1.msra.mxu0 %v852
      %989 = vmatprep.subr.mxu0 %v850
      %990 = vmatpush1.msra.mxu0 %v853
      %991 = vmatprep.subr.mxu0 %v851
      %992 = vmatpush1.msra.mxu0 %v854
      %993 = vmatprep.subr.mxu0 %v876
      %994 = vmatpush1.msra.mxu0 %v879
      %995 = vmatprep.subr.mxu0 %v877
      %996 = vmatpush1.msra.mxu0 %v880
      %997 = vmatprep.subr.mxu0 %v878
      %998 = vmatpush1.msra.mxu0 %v881
      %999 = vmatprep.subr.mxu0 %v903
      %1000 = vmatpush1.msra.mxu0 %v906
      %1001 = vmatprep.subr.mxu0 %v904
      %1002 = vmatpush1.msra.mxu0 %v907
      %1003 = vmatprep.subr.mxu0 %v905
      %1004 = vmatpush1.msra.mxu0 %v908
      %1005 = vmatprep.subr.mxu0 %v930
      %1006 = vmatpush1.msra.mxu0 %v933
      %1007 = vmatprep.subr.mxu0 %v931
      %1008 = vmatpush1.msra.mxu0 %v934
      %1009 = vmatprep.subr.mxu0 %v932
      %1010 = vmatpush1.msra.mxu0 %v935
      %1011 = vmatprep.subr.mxu0 0.0
      %1012 = vmatpush1.msra.mxu0 0.0
      %1013 = vmatprep.subr.mxu0 0.0
      %1014 = vmatpush1.msra.mxu0 0.0
      %1015 = vmatprep.subr.mxu0 0.0
      %1016 = vmatpush1.msra.mxu0 0.0
      %1017 = vmatprep.subr.mxu0 0.0
      %1018 = vmatpush1.msra.mxu0 0.0
      %1019 = vmatprep.subr.mxu0 0.0
      %1020 = vmatpush1.msra.mxu0 0.0
      %1021 = vmatprep.mubr.f32.mxu0 %v952
      %1022 = vmatmul.mubr.f32.gmra.mrb[0].mxu0 %v719
      %v1023 = vpop.f32.mrb[0].mxu0
      %v1024 = vadd.f32 %v944, %v1023
      %v1025 = vpop.f32.mrb[0].mxu0
      %v1026 = vadd.f32 %v944, %v1025
      %1027 = vmatprep.mubr.f32.mxu0 %v955
      %1028 = vmatmul.mubr.f32.gmra.mrb[0].mxu0 %v721
      %v1029 = vpop.f32.mrb[0].mxu0
      %v1030 = vadd.f32 %v949, %v1029
      %v1031 = vpop.f32.mrb[0].mxu0
      %v1032 = vadd.f32 %v949, %v1031
      %1033 = vdwg.mxu0
      %1034 = vmatprep.subr.mxu0 0.0
      %1035 = vmatpush1.msra.mxu0 %v741
      %1036 = vmatprep.subr.mxu0 0.0
      %1037 = vmatpush1.msra.mxu0 %v742
      %1038 = vmatprep.subr.mxu0 0.0
      %1039 = vmatpush1.msra.mxu0 %v743
      %1040 = vmatprep.subr.mxu0 0.0
      %1041 = vmatpush1.msra.mxu0 %v768
      %1042 = vmatprep.subr.mxu0 0.0
      %1043 = vmatpush1.msra.mxu0 %v769
      %1044 = vmatprep.subr.mxu0 0.0
      %1045 = vmatpush1.msra.mxu0 %v770
      %1046 = vmatprep.subr.mxu0 0.0
      %1047 = vmatpush1.msra.mxu0 %v795
      %1048 = vmatprep.subr.mxu0 0.0
      %1049 = vmatpush1.msra.mxu0 %v796
      %1050 = vmatprep.subr.mxu0 0.0
      %1051 = vmatpush1.msra.mxu0 %v797
      %1052 = vmatprep.subr.mxu0 0.0
      %1053 = vmatpush1.msra.mxu0 %v822
      %1054 = vmatprep.subr.mxu0 0.0
      %1055 = vmatpush1.msra.mxu0 %v823
      %1056 = vmatprep.subr.mxu0 0.0
      %1057 = vmatpush1.msra.mxu0 %v824
      %1058 = vmatprep.subr.mxu0 0.0
      %1059 = vmatpush1.msra.mxu0 %v712
      %1060 = vmatprep.subr.mxu0 0.0
      %1061 = vmatpush1.msra.mxu0 %v715
      %1062 = vmatprep.subr.mxu0 0.0
      %1063 = vmatpush1.msra.mxu0 %v718
      %1064 = vmatprep.subr.mxu0 0.0
      %1065 = vmatpush1.msra.mxu0 %v855
      %1066 = vmatprep.subr.mxu0 0.0
      %1067 = vmatpush1.msra.mxu0 %v856
      %1068 = vmatprep.subr.mxu0 0.0
      %1069 = vmatpush1.msra.mxu0 %v857
      %1070 = vmatprep.subr.mxu0 0.0
      %1071 = vmatpush1.msra.mxu0 %v882
      %1072 = vmatprep.subr.mxu0 0.0
      %1073 = vmatpush1.msra.mxu0 %v883
      %1074 = vmatprep.subr.mxu0 0.0
      %1075 = vmatpush1.msra.mxu0 %v884
      %1076 = vmatprep.subr.mxu0 0.0
      %1077 = vmatpush1.msra.mxu0 %v909
      %1078 = vmatprep.subr.mxu0 0.0
      %1079 = vmatpush1.msra.mxu0 %v910
      %1080 = vmatprep.subr.mxu0 0.0
      %1081 = vmatpush1.msra.mxu0 %v911
      %1082 = vmatprep.subr.mxu0 0.0
      %1083 = vmatpush1.msra.mxu0 %v936
      %1084 = vmatprep.subr.mxu0 0.0
      %1085 = vmatpush1.msra.mxu0 %v937
      %1086 = vmatprep.subr.mxu0 0.0
      %1087 = vmatpush1.msra.mxu0 %v938
      %1088 = vmatprep.subr.mxu0 0.0
      %1089 = vmatpush1.msra.mxu0 0.0
      %1090 = vmatprep.subr.mxu0 0.0
      %1091 = vmatpush1.msra.mxu0 0.0
      %1092 = vmatprep.subr.mxu0 0.0
      %1093 = vmatpush1.msra.mxu0 0.0
      %1094 = vmatprep.subr.mxu0 0.0
      %1095 = vmatpush1.msra.mxu0 0.0
      %1096 = vmatprep.subr.mxu0 0.0
      %1097 = vmatpush1.msra.mxu0 0.0
      %1098 = vmatprep.mubr.f32.mxu0 %v952
      %1099 = vmatmul.mubr.f32.gmra.mrb[0].mxu0 %v719
      %v1100 = vpop.f32.mrb[0].mxu0
      %v1101 = vadd.f32 %v944, %v1100
      %v1102 = vpop.f32.mrb[0].mxu0
      %1103 = vmatprep.mubr.f32.mxu0 %v955
      %1104 = vmatmul.mubr.f32.gmra.mrb[0].mxu0 %v721
      %v1105 = vpop.f32.mrb[0].mxu0
      %v1106 = vadd.f32 %v949, %v1105
      %v1107 = vpop.f32.mrb[0].mxu0
      %1108 = vdwg.mxu0
      %v1109 = vmax.f32 %v1024, 0.0
      %v1110 = vmax.f32 %v1026, 0.0
      %v1111 = vmax.f32 %v1101, 0.0
      %v1112 = vmax.f32 %v1030, 0.0
      %v1113 = vmax.f32 %v1032, 0.0
      %v1114 = vmax.f32 %v1106, 0.0
      %1115 = vst [vmem:[%s224] sm:$0xff] %v1109
      %1116 = vst [vmem:[%s224 + $0x8] sm:$0xff] %v1110
      %1117 = vst [vmem:[%s224 + $0x10] sm:$0xff] %v1111
      %1118 = vst [vmem:[%s224 + $0x18] sm:$0xff] %v1112
      %1119 = vst [vmem:[%s224 + $0x20] sm:$0xff] %v1113
      %1120 = vst [vmem:[%s224 + $0x28] sm:$0xff] %v1114
      %p1121 = scmp.lt.s32.totalorder %s16, 1
      %s1122 = scalar_select %p1121, %s16, 1
      %s1123 = smul.addr %s1122, 6
      %s1124 = smul.addr %s1123, 8
      %s1125 = scalar_lea.vmem %s5, %s1124
      // Predicated region
      $region41: #{action_net_forward.1} parent=39 // pred_check
        %p1126 = pneg %p144
      $region42: #{action_net_forward.1} parent=39 // pred_check_branch
        %1128 = sbr.rel (%p1126) target = $region44
      $region43: #{action_net_forward.1} parent=39 // pred_region
        _
      $region44: #{action_net_forward.1} parent=39 // pred_fallthru
        _
    $region40: #{action_net_forward.1} parent=5 // pred_fallthru
      _
    %p1129 = scmp.le.s32.totalorder 2, %s11
    // Predicated region
    $region45: #{action_net_forward.1} parent=5 // pred_check
      %p1130 = pneg %p1129
    $region46: #{action_net_forward.1} parent=5 // pred_check_branch
      %1132 = sbr.rel (%p1130) target = $region48
    $region47: #{action_net_forward.1} parent=5 // pred_region
      %s1133 = ssub.s32 %s11, 2
      // Predicated region
      $region49: #{action_net_forward.1} parent=47 // pred_check
        %p1134 = pneg %p150
      $region50: #{action_net_forward.1} parent=47 // pred_check_branch
        %1136 = sbr.rel (%p1134) target = $region52
      $region51: #{action_net_forward.1} parent=47 // pred_region
        %p1137 = scmp.lt.s32.totalorder %s17, 1
        %s1138 = scalar_select %p1137, %s17, 1
        %s1139 = smul.addr %s1138, 6
        %s1140 = smul.addr %s1139, 8
        %s1141 = scalar_lea.vmem %s5, %s1140
      $region52: #{action_net_forward.1} parent=47 // pred_fallthru
        _
    $region48: #{action_net_forward.1} parent=5 // pred_fallthru
      _
  $region6: #{action_net_forward.1} parent=0 // loop_footer
    %s15 = sadd.s32 1, %s11
  $region7: #{action_net_forward.1} parent=0 // loop_footer_branch
    %10 = sbr.rel target = $region3
  $region8: #{action_net_forward.1} parent=0 // loop_exit
    _

</llo_original>
